<compile_context>
chip_gen: v5e
topology: v5e:2x2
jax: 0.10.0
libtpu: 0.0.40
codegen_flags: <defaults>
</compile_context>

<pallas_src>
import functools
import math

import jax
import jax.numpy as jnp
from jax.experimental import pallas as pl
from jax.experimental.pallas import tpu as pltpu

_NEG_LARGE = -1e30          # finite "minus infinity" (no exp(-inf - -inf) NaN hazard)
_LANE = 128
_MIB = 1024 * 1024


def _pick_tile(n, target):
    """Largest divisor of n that is <= target and a multiple of 8 (else the full dim)."""
    if n <= target:
        return n
    for t in range(target, 7, -1):
        if n % t == 0 and t % 8 == 0:
            return t
    return n


def _round_up(n, m):
    return ((n + m - 1) // m) * m


def _vmem_limit(nbytes):
    # Budgeted from the tile sizes, x2 for double-buffer slack, clamped to [8, 64] MiB.
    return int(min(max(2 * nbytes + 2 * _MIB, 8 * _MIB), 64 * _MIB))


# --------------------------------------------------------------------------------------
# Kernel 1: fused QKV projection, tiled over M = B*T rows.
# --------------------------------------------------------------------------------------
def _qkv_proj_kernel(x_ref, w_ref, q_ref, k_ref, v_ref, *, d_out):
    # x_ref: (tm, d_in) bf16 | w_ref: (d_in, 3*d_out) bf16 (softmax scale folded into Wq)
    # q/k/v_ref: (tm, d_out) bf16
    qkv = jnp.dot(x_ref[...], w_ref[...], preferred_element_type=jnp.float32)
    q_ref[...] = qkv[:, :d_out].astype(q_ref.dtype)
    k_ref[...] = qkv[:, d_out:2 * d_out].astype(k_ref.dtype)
    v_ref[...] = qkv[:, 2 * d_out:].astype(v_ref.dtype)


# --------------------------------------------------------------------------------------
# Kernel 2: flash-style tiled causal attention + fused output projection.
# --------------------------------------------------------------------------------------
def _flash_attn_kernel(q_ref, k_ref, v_ref, wo_ref, bo_ref, out_ref,
                       m_scr, l_scr, acc_scr, ctx_scr,
                       *, num_heads, head_dim, tq, tk):
    # q_ref: (1, tq, d_out) bf16 | k/v_ref: (1, tk, d_out) bf16
    # wo_ref: (d_out, d_out_p) bf16 | bo_ref: (1, d_out_p) f32 | out_ref: (1, tq, d_out_p)
    # scratch: m/l (H, tq, 1) f32, acc (H, tq, hd) f32, ctx (tq, d_out) bf16
    qi = pl.program_id(1)
    ki = pl.program_id(2)
    n_kv = pl.num_programs(2)
    q_start = qi * tq
    kv_start = ki * tk

    @pl.when(ki == 0)
    def _init():
        m_scr[...] = jnp.full(m_scr.shape, _NEG_LARGE, m_scr.dtype)
        l_scr[...] = jnp.zeros(l_scr.shape, l_scr.dtype)
        acc_scr[...] = jnp.zeros(acc_scr.shape, acc_scr.dtype)

    # Skip kv blocks strictly above the causal diagonal (their K/V DMAs are also elided
    # via the clamped kv index_map in the wrapper).
    @pl.when(kv_start <= q_start + tq - 1)
    def _compute():
        # Additive causal-mask bias for this (q, kv) tile, shared by all heads.
        row = q_start + jax.lax.broadcasted_iota(jnp.int32, (tq, tk), 0)
        col = kv_start + jax.lax.broadcasted_iota(jnp.int32, (tq, tk), 1)
        bias = jnp.where(col > row, jnp.float32(_NEG_LARGE), jnp.float32(0.0))

        for h in range(num_heads):                     # unrolled, static lane slices
            sl = slice(h * head_dim, (h + 1) * head_dim)
            q_h = q_ref[0, :, sl]                      # (tq, hd) bf16, scale pre-folded
            k_h = k_ref[0, :, sl]                      # (tk, hd) bf16
            v_h = v_ref[0, :, sl]                      # (tk, hd) bf16
            # QK^T: contraction on the minor dim of both operands (no explicit .T).
            s = jnp.einsum("qd,kd->qk", q_h, k_h,
                           preferred_element_type=jnp.float32) + bias     # (tq, tk) f32
            m_prev = m_scr[h]                                             # (tq, 1)
            m_new = jnp.maximum(m_prev, jnp.max(s, axis=-1, keepdims=True))
            alpha = jnp.exp(m_prev - m_new)
            p = jnp.exp(s - m_new)                                        # (tq, tk) f32
            l_scr[h] = alpha * l_scr[h] + jnp.sum(p, axis=-1, keepdims=True)
            acc_scr[h] = alpha * acc_scr[h] + jnp.dot(
                p.astype(jnp.bfloat16), v_h, preferred_element_type=jnp.float32)
            m_scr[h] = m_new
            # TODO(synk): training-mode dropout on p not implemented (eval / p_drop = 0).

    @pl.when(ki == n_kv - 1)
    def _finalize():
        # Normalize each head into a (tq, d_out) context slab, then ONE output-projection
        # matmul contracting K = H*head_dim = d_out (== concat(heads) @ Wo), lane-dense out.
        for h in range(num_heads):
            sl = slice(h * head_dim, (h + 1) * head_dim)
            inv_l = pl.reciprocal(l_scr[h], approx=True)   # EUP slot; ~1e-3 rel. error
            ctx_scr[:, sl] = (acc_scr[h] * inv_l).astype(ctx_scr.dtype)
        out = jnp.dot(ctx_scr[...], wo_ref[...], preferred_element_type=jnp.float32)
        out_ref[0] = (out + bo_ref[...]).astype(out_ref.dtype)


# --------------------------------------------------------------------------------------
# Wrapper
# --------------------------------------------------------------------------------------
def multi_head_attention(x, wq, wk, wv, wo, bo, *, num_heads,
                         tile_m=256, tile_q=256, tile_k=256):
    B, T, d_in = x.shape
    d_out = wq.shape[1]
    assert d_out % num_heads == 0, "d_out must be divisible by num_heads"
    head_dim = d_out // num_heads
    scale = 1.0 / math.sqrt(head_dim)

    M = B * T
    tm = _pick_tile(M, tile_m)
    tq = _pick_tile(T, tile_q)
    tk = _pick_tile(T, tile_k)
    d_out_p = _round_up(d_out, _LANE)   # lane-dense final stores; padding sliced off below

    # One-time wrapper-side weight prep: fold softmax scale into Wq, fuse QKV, cast bf16.
    w_qkv = jnp.concatenate([wq * scale, wk, wv], axis=1).astype(jnp.bfloat16)
    wo_p = jnp.pad(wo, ((0, 0), (0, d_out_p - d_out))).astype(jnp.bfloat16)
    bo_p = jnp.pad(jnp.asarray(bo, jnp.float32).reshape(1, d_out),
                   ((0, 0), (0, d_out_p - d_out)))

    # ---- Kernel 1: fused QKV projection, tiled over M = B*T ("parallel") ----
    x2 = x.reshape(M, d_in).astype(jnp.bfloat16)      # halves activation HBM->VMEM bytes
    qkv_vmem = (2 * tm * d_in * 2 + 3 * 2 * tm * d_out * 2 + d_in * 3 * d_out * 2
                + tm * 3 * d_out * 4)
    q, k, v = pl.pallas_call(
        functools.partial(_qkv_proj_kernel, d_out=d_out),
        out_shape=tuple(jax.ShapeDtypeStruct((M, d_out), jnp.bfloat16) for _ in range(3)),
        grid_spec=pltpu.PrefetchScalarGridSpec(
            num_scalar_prefetch=0,
            grid=(M // tm,),
            in_specs=[
                pl.BlockSpec((tm, d_in), lambda i: (i, 0)),
                pl.BlockSpec((d_in, 3 * d_out), lambda i: (0, 0)),   # weights stay resident
            ],
            out_specs=[pl.BlockSpec((tm, d_out), lambda i: (i, 0)) for _ in range(3)],
        ),
        compiler_params=pltpu.CompilerParams(
            dimension_semantics=("parallel",),
            vmem_limit_bytes=_vmem_limit(qkv_vmem)),
    )(x2, w_qkv)
    # TODO(synk): also tile K = d_in with an f32 VMEM accumulator when d_in is large.

    # Free reshapes only — no extra HBM transpose between the two kernels.
    q = q.reshape(B, T, d_out)
    k = k.reshape(B, T, d_out)
    v = v.reshape(B, T, d_out)

    # ---- Kernel 2: flash-style tiled causal attention + fused output projection ----
    def q_map(b, qi, ki):
        return (b, qi, 0)

    def kv_map(b, qi, ki):
        # Clamp to the last causally-visible kv block for this q block: skipped steps keep
        # the same block index, so Pallas elides their DMA.
        return (b, jnp.minimum(ki, (qi * tq + tq - 1) // tk), 0)

    attn_vmem = (2 * tq * d_out * 2 + 2 * 2 * tk * d_out * 2       # q/k/v double buffers
                 + 2 * tq * d_out_p * 4                            # out double buffer
                 + d_out * d_out_p * 2 + d_out_p * 4               # Wo + bias (resident)
                 + num_heads * tq * (head_dim + 2) * 4             # m/l/acc scratch
                 + tq * d_out * 2                                  # ctx scratch
                 + 2 * tq * tk * 4)                                # score/p temporaries

    out = pl.pallas_call(
        functools.partial(_flash_attn_kernel, num_heads=num_heads,
                          head_dim=head_dim, tq=tq, tk=tk),
        out_shape=jax.ShapeDtypeStruct((B, T, d_out_p), x.dtype),
        grid_spec=pltpu.PrefetchScalarGridSpec(
            num_scalar_prefetch=0,
            grid=(B, T // tq, T // tk),
            in_specs=[
                pl.BlockSpec((1, tq, d_out), q_map),
                pl.BlockSpec((1, tk, d_out), kv_map),
                pl.BlockSpec((1, tk, d_out), kv_map),
                pl.BlockSpec((d_out, d_out_p), lambda b, qi, ki: (0, 0)),
                pl.BlockSpec((1, d_out_p), lambda b, qi, ki: (0, 0)),
            ],
            out_specs=pl.BlockSpec((1, tq, d_out_p), lambda b, qi, ki: (b, qi, 0)),
            scratch_shapes=[
                pltpu.VMEM((num_heads, tq, 1), jnp.float32),          # running max
                pltpu.VMEM((num_heads, tq, 1), jnp.float32),          # running sum
                pltpu.VMEM((num_heads, tq, head_dim), jnp.float32),   # output accumulator
                pltpu.VMEM((tq, d_out), jnp.bfloat16),                # assembled context
            ],
        ),
        compiler_params=pltpu.CompilerParams(
            dimension_semantics=("parallel", "parallel", "arbitrary"),
            vmem_limit_bytes=_vmem_limit(attn_vmem)),
    )(q, k, v, wo_p, bo_p)

    return out[:, :, :d_out] if d_out_p != d_out else out


def _reference(x, wq, wk, wv, wo, bo, *, num_heads):
    # Pure-JAX f32 reference mirroring the PyTorch forward (eval mode, p_drop = 0).
    B, T, d_in = x.shape
    d_out = wq.shape[1]
    hd = d_out // num_heads
    q = (x @ wq).reshape(B, T, num_heads, hd).transpose(0, 2, 1, 3)
    k = (x @ wk).reshape(B, T, num_heads, hd).transpose(0, 2, 1, 3)
    v = (x @ wv).reshape(B, T, num_heads, hd).transpose(0, 2, 1, 3)
    scores = jnp.einsum("bhqd,bhkd->bhqk", q, k)
    mask = jnp.triu(jnp.ones((T, T), dtype=bool), k=1)
    scores = jnp.where(mask, -jnp.inf, scores)
    w = jax.nn.softmax(scores / math.sqrt(hd), axis=-1)
    ctx = jnp.einsum("bhqk,bhkd->bhqd", w, v).transpose(0, 2, 1, 3).reshape(B, T, d_out)
    return ctx @ wo + bo[None, None, :]


if __name__ == "__main__":
    # Small shapes consistent with the module's forward.
    B, T, d_in = 2, 8, 32
    d_out, num_heads = 32, 4

    key = jax.random.PRNGKey(0)
    kx, kq, kk, kv, ko, kb = jax.random.split(key, 6)

    x = jax.random.normal(kx, (B, T, d_in), dtype=jnp.float32)
    # nn.Linear weights stored transposed -> (in_features, out_features); qkv_bias=False.
    wq = jax.random.normal(kq, (d_in, d_out), dtype=jnp.float32) * 0.1
    wk = jax.random.normal(kk, (d_in, d_out), dtype=jnp.float32) * 0.1
    wv = jax.random.normal(kv, (d_in, d_out), dtype=jnp.float32) * 0.1
    wo = jax.random.normal(ko, (d_out, d_out), dtype=jnp.float32) * 0.1
    bo = jax.random.normal(kb, (1, d_out), dtype=jnp.float32) * 0.1

    out = multi_head_attention(x, wq, wk, wv, wo, bo, num_heads=num_heads)
    out = jax.block_until_ready(out)

    ref = _reference(x, wq, wk, wv, wo, bo[0], num_heads=num_heads)
    assert out.shape == (B, T, d_out)
    # bf16 MXU operands + approx reciprocal -> compare against the f32 reference loosely.
    assert jnp.allclose(out, ref, atol=5e-2, rtol=5e-2), "mismatch vs reference"

    print("KERNEL_OK")
</pallas_src>

<mosaic_0001>
module attributes {stable_mosaic.version = 11 : i64} {
  func.func @_qkv_proj_kernel(%arg0: i32, %arg1: memref<16x32xbf16, #tpu.memory_space<vmem>>, %arg2: memref<32x96xbf16, #tpu.memory_space<vmem>>, %arg3: memref<16x32xbf16, #tpu.memory_space<vmem>>, %arg4: memref<16x32xbf16, #tpu.memory_space<vmem>>, %arg5: memref<16x32xbf16, #tpu.memory_space<vmem>>) attributes {dimension_semantics = [#tpu.dimension_semantics<parallel>], iteration_bounds = array<i64: 1>, scalar_prefetch = 0 : i64, scratch_operands = 0 : i64, tpu.core_type = #tpu.core_type<tc>, window_params = [{transform_indices = @transform_0, window_bounds = array<i64: 16, 32>}, {pipeline_mode = #tpu.pipeline_mode<synchronous>, transform_indices = @transform_1, window_bounds = array<i64: 32, 96>}, {transform_indices = @transform_2, window_bounds = array<i64: 16, 32>}, {transform_indices = @transform_3, window_bounds = array<i64: 16, 32>}, {transform_indices = @transform_4, window_bounds = array<i64: 16, 32>}]} {
    %c0 = arith.constant 0 : index
    %c0_0 = arith.constant 0 : index
    %0 = vector.load %arg1[%c0, %c0_0] : memref<16x32xbf16, #tpu.memory_space<vmem>>, vector<16x32xbf16>
    %c0_1 = arith.constant 0 : index
    %c0_2 = arith.constant 0 : index
    %1 = vector.load %arg2[%c0_1, %c0_2] : memref<32x96xbf16, #tpu.memory_space<vmem>>, vector<32x96xbf16>
    %cst = arith.constant dense<0.000000e+00> : vector<16x96xf32>
    %2 = tpu.matmul %0, %1, %cst {dimension_numbers = #tpu.dot_dimension_numbers<[1], [0], [0], [1], [0, 0, 1, 1], [], []>} : vector<16x32xbf16>, vector<32x96xbf16>, vector<16x96xf32> -> vector<16x96xf32>
    %3 = vector.extract_strided_slice %2 {offsets = [0, 0], sizes = [16, 32], strides = [1, 1]} : vector<16x96xf32> to vector<16x32xf32>
    %4 = arith.truncf %3 : vector<16x32xf32> to vector<16x32xbf16>
    %c0_3 = arith.constant 0 : index
    %c0_4 = arith.constant 0 : index
    %5 = vector.load %arg3[%c0_3, %c0_4] : memref<16x32xbf16, #tpu.memory_space<vmem>>, vector<16x32xbf16>
    tpu.vector_store %arg3[%c0_3, %c0_4], %4 {strides = array<i32>} : memref<16x32xbf16, #tpu.memory_space<vmem>>, vector<16x32xbf16>,
    %6 = vector.extract_strided_slice %2 {offsets = [0, 32], sizes = [16, 32], strides = [1, 1]} : vector<16x96xf32> to vector<16x32xf32>
    %7 = arith.truncf %6 : vector<16x32xf32> to vector<16x32xbf16>
    %c0_5 = arith.constant 0 : index
    %c0_6 = arith.constant 0 : index
    %8 = vector.load %arg4[%c0_5, %c0_6] : memref<16x32xbf16, #tpu.memory_space<vmem>>, vector<16x32xbf16>
    tpu.vector_store %arg4[%c0_5, %c0_6], %7 {strides = array<i32>} : memref<16x32xbf16, #tpu.memory_space<vmem>>, vector<16x32xbf16>,
    %9 = vector.extract_strided_slice %2 {offsets = [0, 64], sizes = [16, 32], strides = [1, 1]} : vector<16x96xf32> to vector<16x32xf32>
    %10 = arith.truncf %9 : vector<16x32xf32> to vector<16x32xbf16>
    %c0_7 = arith.constant 0 : index
    %c0_8 = arith.constant 0 : index
    %11 = vector.load %arg5[%c0_7, %c0_8] : memref<16x32xbf16, #tpu.memory_space<vmem>>, vector<16x32xbf16>
    tpu.vector_store %arg5[%c0_7, %c0_8], %10 {strides = array<i32>} : memref<16x32xbf16, #tpu.memory_space<vmem>>, vector<16x32xbf16>,
    return
  }
  func.func @transform_0(%arg0: i32) -> (i32, i32) {
    %c0_i32 = arith.constant 0 : i32
    %c0_i32_0 = arith.constant 0 : i32
    return %arg0, %c0_i32 : i32, i32
  }
  func.func @transform_1(%arg0: i32) -> (i32, i32) {
    %c0_i32 = arith.constant 0 : i32
    %c0_i32_0 = arith.constant 0 : i32
    %c0_i32_1 = arith.constant 0 : i32
    return %c0_i32, %c0_i32_0 : i32, i32
  }
  func.func @transform_2(%arg0: i32) -> (i32, i32) {
    %c0_i32 = arith.constant 0 : i32
    %c0_i32_0 = arith.constant 0 : i32
    return %arg0, %c0_i32 : i32, i32
  }
  func.func @transform_3(%arg0: i32) -> (i32, i32) {
    %c0_i32 = arith.constant 0 : i32
    %c0_i32_0 = arith.constant 0 : i32
    return %arg0, %c0_i32 : i32, i32
  }
  func.func @transform_4(%arg0: i32) -> (i32, i32) {
    %c0_i32 = arith.constant 0 : i32
    %c0_i32_0 = arith.constant 0 : i32
    return %arg0, %c0_i32 : i32, i32
  }
}

</mosaic_0001>

<llo_original>
// kernel: tpu_custom_call.1
$region0: #{tpu_custom_call.1}
  #allocation0 [shape = 'u32[]', space=smem, size = 0x4, offset = 0x4, fixed_abs, tag = 'smem constant byte address 0x4 - core index']
  #allocation1 [shape = 'u32[72,128]{1,0:T(1,128)}', space=vmem, size = 0x9000, scoped, tag = 'internal scratch']
  %s0 = inlined_call_operand.hbm [shape: bf16[16,32], index: 0, kind: input, shape index: {}]
  %s1 = inlined_call_operand.hbm [shape: bf16[32,96], index: 1, kind: input, shape index: {}]
  %s2 = inlined_call_operand.hbm [shape: bf16[16,32], index: 2, kind: output, shape index: {0}]
  %s3 = inlined_call_operand.hbm [shape: bf16[16,32], index: 3, kind: output, shape index: {1}]
  %s4 = inlined_call_operand.hbm [shape: bf16[16,32], index: 4, kind: output, shape index: {2}]
  %5 = xla_tuple %s2, %s3, %s4
  %s6 = sld [smem:[#allocation0]]
  $region42: #{tpu_custom_call.1} parent=0
    _
  %s8 = ssub.s32 1, %s6
  %s9 = scalar_select 0, %s8, %s6
  $region1: #{tpu_custom_call.1} parent=0
    #allocation2 [shape = 'u8[4096]{0}', space=vmem, size = 0x1000, scoped, tag = 'input window, operand 0, single buffered']
    #allocation3 [shape = 's32[1]{0}', space=sflag, size = 0x4, scoped, tag = 'scoped memory for tpu_custom_call.1']
    #allocation4 [shape = 's32[1]{0}', space=sflag, size = 0x4, scoped, tag = 'scoped memory for tpu_custom_call.1']
    #allocation5 [shape = 'u8[8192]{0}', space=vmem, size = 0x2000, scoped, tag = 'input window, operand 1, single buffered']
    #allocation6 [shape = 's32[1]{0}', space=sflag, size = 0x4, scoped, tag = 'scoped memory for tpu_custom_call.1']
    #allocation7 [shape = 'u8[4096]{0}', space=vmem, size = 0x1000, scoped, tag = 'output window, operand 0, single buffered']
    #allocation8 [shape = 'u8[4096]{0}', space=vmem, size = 0x1000, scoped, tag = 'output window, operand 1, single buffered']
    #allocation9 [shape = 's32[1]{0}', space=sflag, size = 0x4, scoped, tag = 'scoped memory for tpu_custom_call.1']
    #allocation10 [shape = 'u8[4096]{0}', space=vmem, size = 0x1000, scoped, tag = 'output window, operand 2, single buffered']
    %10 = vsyncpa [#allocation3], 0
    %11 = vsyncpa [#allocation6], 0
    %12 = vsyncpa [#allocation4], 0
    %13 = vsyncpa [#allocation9], 0
    // Predicated region
    $region2: #{tpu_custom_call.1} parent=1 // pred_check
      _
    $region3: #{tpu_custom_call.1} parent=1 // pred_check_branch
      %15 = sbr.rel (0) target = $region5
    $region4: #{tpu_custom_call.1} parent=1 // pred_region
      %17 = vsyncadd [#allocation3], 0
      %s18 = sshll.u32 %s0, 4
      %s19 = int_to_ptr.hbm [resolvable:$true] %s18
      %s20 = sshll.u32 [#allocation2], 4
      %s21 = int_to_ptr.vmem [resolvable:$true] %s20
      %26 = dma.hbm_to_vmem [thread:$0]  %s19, 128, %s21, [#allocation3], 64, 64, 4
    $region5: #{tpu_custom_call.1} parent=1 // pred_fallthru
      _
    // Predicated region
    $region6: #{tpu_custom_call.1} parent=1 // pred_check
      _
    $region7: #{tpu_custom_call.1} parent=1 // pred_check_branch
      %28 = sbr.rel (0) target = $region9
    $region8: #{tpu_custom_call.1} parent=1 // pred_region
      %30 = vsyncadd [#allocation6], 0
      %s31 = sshll.u32 %s1, 4
      %s32 = int_to_ptr.hbm [resolvable:$true] %s31
      %s33 = sshll.u32 [#allocation5], 4
      %s34 = int_to_ptr.vmem [resolvable:$true] %s33
      %39 = dma.hbm_to_vmem [thread:$0]  %s32, 256, %s34, [#allocation6], 64, 64, 4
    $region9: #{tpu_custom_call.1} parent=1 // pred_fallthru
      _
    // Predicated region
    $region10: #{tpu_custom_call.1} parent=1 // pred_check
      _
    $region11: #{tpu_custom_call.1} parent=1 // pred_check_branch
      %41 = sbr.rel (0) target = $region13
    $region12: #{tpu_custom_call.1} parent=1 // pred_region
      %43 = dma.done [#allocation3], 128
    $region13: #{tpu_custom_call.1} parent=1 // pred_fallthru
      _
    // Predicated region
    $region14: #{tpu_custom_call.1} parent=1 // pred_check
      _
    $region15: #{tpu_custom_call.1} parent=1 // pred_check_branch
      %45 = sbr.rel (0) target = $region17
    $region16: #{tpu_custom_call.1} parent=1 // pred_region
      %47 = dma.done [#allocation6], 256
    $region17: #{tpu_custom_call.1} parent=1 // pred_fallthru
      _
    %v49 = vld [vmem:[#allocation2] sm:$0xf]
    %v50 = vld [vmem:[#allocation2 + $0x4] sm:$0xf]
    %v51 = vld [vmem:[#allocation5] sm:$0xf]
    %v52 = vld [vmem:[#allocation5 + $0x4] sm:$0xf]
    %v53 = vld [vmem:[#allocation5 + $0x8] sm:$0xf]
    %v54 = vld [vmem:[#allocation5 + $0xc] sm:$0xf]
    %v57 = vunpack.c.l.b16 %v49
    %v58 = vunpack.c.l.b16 %v50
    %v59 = vpack.c.b16 %v58, %v57
    %v64 = vunpack.c.l.b16 %v51
    %v65 = vunpack.c.l.b16 %v52
    %v66 = vunpack.c.l.b16 %v53
    %v67 = vunpack.c.l.b16 %v54
    %v68 = vpack.c.b16 %v65, %v64
    %v69 = vpack.c.b16 %v67, %v66
    %vm72 = vcmask 261120
    %v74 = vsel %vm72, %v59, 0
    %76 = vmatpush.bf16.msra.mxu0 0
    %77 = vmatpush.bf16.msra.mxu0 0
    %78 = vmatpush.bf16.msra.mxu0 0
    %79 = vmatpush.bf16.msra.mxu0 0
    %80 = vmatpush.bf16.msra.mxu0 0
    %81 = vmatpush.bf16.msra.mxu0 0
    %82 = vmatpush.bf16.msra.mxu0 %v69
    %83 = vmatpush.bf16.msra.mxu0 %v68
    %84 = vmatmul.bf16.gmra.mxu0 %v74
    %v85 = vpop.f32.mrf.mxu0
    %v86 = vadd.f32 0.0, %v85
    %v87 = vpop.f32.mrf.mxu0
    %v88 = vadd.f32 0.0, %v87
    %89 = vdwg.mxu0
    %v90 = vpack.c.bf16 %v86, %v86
    %v91 = vpack.c.bf16 %v88, %v88
    %vm92 = vcmask 257024
    %93 = vst.msk [vmem:[#allocation7] sm:$0xf] %vm92, %v90
    %94 = vst.msk [vmem:[#allocation7 + $0x4] sm:$0xf] %vm92, %v91
    %97 = vrot.lane.b32.xlu0 %v90, 96
    %v98 = vpop.permute.xlu0 %97
    %99 = vrot.lane.b32.xlu0 %v91, 96
    %v100 = vpop.permute.xlu0 %99
    %103 = vst.msk [vmem:[#allocation8] sm:$0xf] %vm92, %v98
    %104 = vst.msk [vmem:[#allocation8 + $0x4] sm:$0xf] %vm92, %v100
    %105 = vrot.lane.b32.xlu0 %v90, 64
    %v106 = vpop.permute.xlu0 %105
    %107 = vrot.lane.b32.xlu0 %v91, 64
    %v108 = vpop.permute.xlu0 %107
    %111 = vst.msk [vmem:[#allocation10] sm:$0xf] %vm92, %v106
    %112 = vst.msk [vmem:[#allocation10 + $0x4] sm:$0xf] %vm92, %v108
    // Predicated region
    $region18: #{tpu_custom_call.1} parent=1 // pred_check
      _
    $region19: #{tpu_custom_call.1} parent=1 // pred_check_branch
      %114 = sbr.rel (0) target = $region21
    $region20: #{tpu_custom_call.1} parent=1 // pred_region
      %116 = vsyncadd [#allocation4], 0
      %s117 = sshll.u32 [#allocation7], 4
      %s118 = int_to_ptr.vmem [resolvable:$true] %s117
      %s119 = sshll.u32 %s2, 4
      %s120 = int_to_ptr.hbm [resolvable:$true] %s119
      %125 = dma.vmem_to_hbm [thread:$0]  %s118, 128, %s120, [#allocation4], 64, 64, 4
    $region21: #{tpu_custom_call.1} parent=1 // pred_fallthru
      _
    // Predicated region
    $region22: #{tpu_custom_call.1} parent=1 // pred_check
      _
    $region23: #{tpu_custom_call.1} parent=1 // pred_check_branch
      %127 = sbr.rel (0) target = $region25
    $region24: #{tpu_custom_call.1} parent=1 // pred_region
      %129 = vsyncadd [#allocation9], 0
      %s130 = sshll.u32 [#allocation8], 4
      %s131 = int_to_ptr.vmem [resolvable:$true] %s130
      %s132 = sshll.u32 %s3, 4
      %s133 = int_to_ptr.hbm [resolvable:$true] %s132
      %138 = dma.vmem_to_hbm [thread:$0]  %s131, 128, %s133, [#allocation9], 64, 64, 4
    $region25: #{tpu_custom_call.1} parent=1 // pred_fallthru
      _
    // Predicated region
    $region26: #{tpu_custom_call.1} parent=1 // pred_check
      _
    $region27: #{tpu_custom_call.1} parent=1 // pred_check_branch
      %140 = sbr.rel (0) target = $region29
    $region28: #{tpu_custom_call.1} parent=1 // pred_region
      %142 = vsyncadd [#allocation9], 0
      %s143 = sshll.u32 [#allocation10], 4
      %s144 = int_to_ptr.vmem [resolvable:$true] %s143
      %s145 = sshll.u32 %s4, 4
      %s146 = int_to_ptr.hbm [resolvable:$true] %s145
      %151 = dma.vmem_to_hbm [thread:$0]  %s144, 128, %s146, [#allocation9], 64, 64, 4
    $region29: #{tpu_custom_call.1} parent=1 // pred_fallthru
      _
    // Predicated region
    $region30: #{tpu_custom_call.1} parent=1 // pred_check
      _
    $region31: #{tpu_custom_call.1} parent=1 // pred_check_branch
      %153 = sbr.rel (0) target = $region33
    $region32: #{tpu_custom_call.1} parent=1 // pred_region
      %155 = dma.done [#allocation4], 128
    $region33: #{tpu_custom_call.1} parent=1 // pred_fallthru
      _
    // Predicated region
    $region34: #{tpu_custom_call.1} parent=1 // pred_check
      _
    $region35: #{tpu_custom_call.1} parent=1 // pred_check_branch
      %157 = sbr.rel (0) target = $region37
    $region36: #{tpu_custom_call.1} parent=1 // pred_region
      %159 = dma.done [#allocation9], 128
    $region37: #{tpu_custom_call.1} parent=1 // pred_fallthru
      _
    // Predicated region
    $region38: #{tpu_custom_call.1} parent=1 // pred_check
      _
    $region39: #{tpu_custom_call.1} parent=1 // pred_check_branch
      %161 = sbr.rel (0) target = $region41
    $region40: #{tpu_custom_call.1} parent=1 // pred_region
      %163 = dma.done [#allocation9], 128
    $region41: #{tpu_custom_call.1} parent=1 // pred_fallthru
      _
    %164 = vsyncpa [#allocation3], 1
    %165 = vsyncpa [#allocation6], 1
    %166 = vsyncpa [#allocation4], 1
    %167 = vsyncpa [#allocation9], 1

</llo_original>
